<compile_context>
chip_gen: v5e
topology: v5e:2x2
jax: 0.10.0
libtpu: 0.0.40
codegen_flags: <defaults>
</compile_context>

<pallas_src>
import functools

import jax
import jax.numpy as jnp
from jax.experimental import pallas as pl
from jax.experimental.pallas import tpu as pltpu


LANE = 128  # TPU lane width; feature dims are padded to a multiple of this.


def mlp_kernel(x_ref, w1_ref, b1_ref, w2_ref, b2_ref, w3_ref, b3_ref, o_ref):
    # Layer 1: Linear (bf16 MXU, f32 accum) + bias/ReLU in f32.
    h = jnp.dot(x_ref[...], w1_ref[...], preferred_element_type=jnp.float32)
    h = jnp.maximum(h + b1_ref[...], 0.0)
    # Layer 2.
    h = jnp.dot(h.astype(w2_ref.dtype), w2_ref[...],
                preferred_element_type=jnp.float32)
    h = jnp.maximum(h + b2_ref[...], 0.0)
    # Layer 3.
    h = jnp.dot(h.astype(w3_ref.dtype), w3_ref[...],
                preferred_element_type=jnp.float32)
    o_ref[...] = jnp.maximum(h + b3_ref[...], 0.0).astype(o_ref.dtype)


def _round_up(n, m):
    return ((n + m - 1) // m) * m


def _pad2d(a, rows, cols):
    r, c = a.shape
    return jnp.pad(a, ((0, rows - r), (0, cols - c)))


@functools.partial(jax.jit, static_argnames=("block_batch",))
def mlp_forward(x, w1, b1, w2, b2, w3, b3, *, block_batch=128):
    """Fused 3-layer MLP forward.  x: [batch, in_dim] f32; wi: [fan_in, fan_out]; bi: [1, fan_out]."""
    batch, in_dim = x.shape
    hid1, hid2, out_dim = w1.shape[1], w2.shape[1], w3.shape[1]

    # --- pad to lane-dense shapes (exactness preserved: zero pads + ReLU(0)=0) ---
    in_p, h1_p, h2_p, out_p = (_round_up(d, LANE) for d in (in_dim, hid1, hid2, out_dim))
    tb = block_batch
    batch_p = _round_up(batch, tb)

    xp = _pad2d(x, batch_p, in_p).astype(jnp.bfloat16)
    w1p = _pad2d(w1, in_p, h1_p).astype(jnp.bfloat16)
    w2p = _pad2d(w2, h1_p, h2_p).astype(jnp.bfloat16)
    w3p = _pad2d(w3, h2_p, out_p).astype(jnp.bfloat16)
    b1p = _pad2d(b1, 1, h1_p)   # biases stay f32 (epilogue is f32)
    b2p = _pad2d(b2, 1, h2_p)
    b3p = _pad2d(b3, 1, out_p)

    n_tiles = batch_p // tb

    def resident(arr):
        # whole array resident in VMEM; same block every grid step -> DMA'd once.
        return pl.BlockSpec(arr.shape, lambda i: tuple(0 for _ in arr.shape))

    flops = 2 * batch_p * (in_p * h1_p + h1_p * h2_p + h2_p * out_p)
    bytes_accessed = (xp.size * 2 + w1p.size * 2 + w2p.size * 2 + w3p.size * 2
                      + b1p.size * 4 + b2p.size * 4 + b3p.size * 4
                      + batch_p * out_p * 4)

    out_padded = pl.pallas_call(
        mlp_kernel,
        out_shape=jax.ShapeDtypeStruct((batch_p, out_p), jnp.float32),
        grid_spec=pltpu.PrefetchScalarGridSpec(
            num_scalar_prefetch=0,
            grid=(n_tiles,),
            in_specs=[
                pl.BlockSpec((tb, in_p), lambda i: (i, 0)),  # x tile streams per step
                resident(w1p), resident(b1p),
                resident(w2p), resident(b2p),
                resident(w3p), resident(b3p),
            ],
            out_specs=pl.BlockSpec((tb, out_p), lambda i: (i, 0)),
        ),
        compiler_params=pltpu.CompilerParams(
            dimension_semantics=("parallel",),  # shard batch tiles across TCs on v7x
        ),
        cost_estimate=pl.CostEstimate(
            flops=flops, transcendentals=0, bytes_accessed=bytes_accessed),
    )(xp, w1p, b1p, w2p, b2p, w3p, b3p)

    return out_padded[:batch, :out_dim]


def init_params(key, in_dim, hid1, hid2, out_dim):
    # Synthetic init mimicking PyTorch nn.Linear's uniform(-1/sqrt(fan_in), 1/sqrt(fan_in)).
    ks = jax.random.split(key, 6)

    def linear(kw, kb, fan_in, fan_out):
        bound = 1.0 / jnp.sqrt(fan_in)
        w = jax.random.uniform(kw, (fan_in, fan_out), jnp.float32, -bound, bound)
        b = jax.random.uniform(kb, (1, fan_out), jnp.float32, -bound, bound)
        return w, b

    w1, b1 = linear(ks[0], ks[1], in_dim, hid1)
    w2, b2 = linear(ks[2], ks[3], hid1, hid2)
    w3, b3 = linear(ks[4], ks[5], hid2, out_dim)
    return w1, b1, w2, b2, w3, b3


if __name__ == "__main__":
    # Small shapes consistent with the module's Linear stack.
    batch, in_dim, hid1, hid2, out_dim = 256, 32, 64, 32, 16

    key = jax.random.PRNGKey(0)
    kx, kp = jax.random.split(key)
    x = jax.random.normal(kx, (batch, in_dim), jnp.float32)
    params = init_params(kp, in_dim, hid1, hid2, out_dim)

    out = mlp_forward(x, *params, block_batch=128)
    out = jax.block_until_ready(out)
    assert out.shape == (batch, out_dim)

    # Reference with the same dtype path (bf16 inputs to each matmul, f32 accum/epilogue).
    w1, b1, w2, b2, w3, b3 = params
    hp = jax.lax.Precision.HIGHEST

    def bf(a):
        return a.astype(jnp.bfloat16).astype(jnp.float32)

    h = jnp.maximum(jnp.dot(bf(x), bf(w1), precision=hp) + b1, 0.0)
    h = jnp.maximum(jnp.dot(bf(h), bf(w2), precision=hp) + b2, 0.0)
    ref = jnp.maximum(jnp.dot(bf(h), bf(w3), precision=hp) + b3, 0.0)

    assert jnp.allclose(out, ref, atol=1e-3, rtol=1e-3), \
        f"max abs err = {jnp.max(jnp.abs(out - ref))}"

    print("KERNEL_OK")
</pallas_src>

<mosaic_0001>
module attributes {stable_mosaic.version = 11 : i64} {
  func.func @mlp_kernel(%arg0: i32, %arg1: memref<128x128xbf16, #tpu.memory_space<vmem>>, %arg2: memref<128x128xbf16, #tpu.memory_space<vmem>>, %arg3: memref<1x128xf32, #tpu.memory_space<vmem>>, %arg4: memref<128x128xbf16, #tpu.memory_space<vmem>>, %arg5: memref<1x128xf32, #tpu.memory_space<vmem>>, %arg6: memref<128x128xbf16, #tpu.memory_space<vmem>>, %arg7: memref<1x128xf32, #tpu.memory_space<vmem>>, %arg8: memref<128x128xf32, #tpu.memory_space<vmem>>) attributes {dimension_semantics = [#tpu.dimension_semantics<parallel>], iteration_bounds = array<i64: 2>, scalar_prefetch = 0 : i64, scratch_operands = 0 : i64, tpu.core_type = #tpu.core_type<tc>, window_params = [{transform_indices = @transform_0, window_bounds = array<i64: 128, 128>}, {pipeline_mode = #tpu.pipeline_mode<synchronous>, transform_indices = @transform_1, window_bounds = array<i64: 128, 128>}, {pipeline_mode = #tpu.pipeline_mode<synchronous>, transform_indices = @transform_2, window_bounds = array<i64: 1, 128>}, {pipeline_mode = #tpu.pipeline_mode<synchronous>, transform_indices = @transform_3, window_bounds = array<i64: 128, 128>}, {pipeline_mode = #tpu.pipeline_mode<synchronous>, transform_indices = @transform_4, window_bounds = array<i64: 1, 128>}, {pipeline_mode = #tpu.pipeline_mode<synchronous>, transform_indices = @transform_5, window_bounds = array<i64: 128, 128>}, {pipeline_mode = #tpu.pipeline_mode<synchronous>, transform_indices = @transform_6, window_bounds = array<i64: 1, 128>}, {transform_indices = @transform_7, window_bounds = array<i64: 128, 128>}]} {
    %c0 = arith.constant 0 : index
    %c0_0 = arith.constant 0 : index
    %0 = vector.load %arg1[%c0, %c0_0] : memref<128x128xbf16, #tpu.memory_space<vmem>>, vector<128x128xbf16>
    %c0_1 = arith.constant 0 : index
    %c0_2 = arith.constant 0 : index
    %1 = vector.load %arg2[%c0_1, %c0_2] : memref<128x128xbf16, #tpu.memory_space<vmem>>, vector<128x128xbf16>
    %cst = arith.constant dense<0.000000e+00> : vector<128x128xf32>
    %2 = tpu.matmul %0, %1, %cst {dimension_numbers = #tpu.dot_dimension_numbers<[1], [0], [0], [1], [0, 0, 1, 1], [], []>} : vector<128x128xbf16>, vector<128x128xbf16>, vector<128x128xf32> -> vector<128x128xf32>
    %c0_3 = arith.constant 0 : index
    %c0_4 = arith.constant 0 : index
    %3 = vector.load %arg3[%c0_3, %c0_4] : memref<1x128xf32, #tpu.memory_space<vmem>>, vector<1x128xf32>
    %4 = vector.broadcast %3 : vector<1x128xf32> to vector<128x128xf32>
    %5 = arith.addf %2, %4 : vector<128x128xf32>
    %cst_5 = arith.constant 0.000000e+00 : f32
    %6 = vector.broadcast %cst_5 : f32 to vector<128x128xf32>
    %7 = arith.maximumf %5, %6 : vector<128x128xf32>
    %8 = arith.truncf %7 : vector<128x128xf32> to vector<128x128xbf16>
    %c0_6 = arith.constant 0 : index
    %c0_7 = arith.constant 0 : index
    %9 = vector.load %arg4[%c0_6, %c0_7] : memref<128x128xbf16, #tpu.memory_space<vmem>>, vector<128x128xbf16>
    %cst_8 = arith.constant dense<0.000000e+00> : vector<128x128xf32>
    %10 = tpu.matmul %8, %9, %cst_8 {dimension_numbers = #tpu.dot_dimension_numbers<[1], [0], [0], [1], [0, 0, 1, 1], [], []>} : vector<128x128xbf16>, vector<128x128xbf16>, vector<128x128xf32> -> vector<128x128xf32>
    %c0_9 = arith.constant 0 : index
    %c0_10 = arith.constant 0 : index
    %11 = vector.load %arg5[%c0_9, %c0_10] : memref<1x128xf32, #tpu.memory_space<vmem>>, vector<1x128xf32>
    %12 = vector.broadcast %11 : vector<1x128xf32> to vector<128x128xf32>
    %13 = arith.addf %10, %12 : vector<128x128xf32>
    %cst_11 = arith.constant 0.000000e+00 : f32
    %14 = vector.broadcast %cst_11 : f32 to vector<128x128xf32>
    %15 = arith.maximumf %13, %14 : vector<128x128xf32>
    %16 = arith.truncf %15 : vector<128x128xf32> to vector<128x128xbf16>
    %c0_12 = arith.constant 0 : index
    %c0_13 = arith.constant 0 : index
    %17 = vector.load %arg6[%c0_12, %c0_13] : memref<128x128xbf16, #tpu.memory_space<vmem>>, vector<128x128xbf16>
    %cst_14 = arith.constant dense<0.000000e+00> : vector<128x128xf32>
    %18 = tpu.matmul %16, %17, %cst_14 {dimension_numbers = #tpu.dot_dimension_numbers<[1], [0], [0], [1], [0, 0, 1, 1], [], []>} : vector<128x128xbf16>, vector<128x128xbf16>, vector<128x128xf32> -> vector<128x128xf32>
    %c0_15 = arith.constant 0 : index
    %c0_16 = arith.constant 0 : index
    %19 = vector.load %arg7[%c0_15, %c0_16] : memref<1x128xf32, #tpu.memory_space<vmem>>, vector<1x128xf32>
    %20 = vector.broadcast %19 : vector<1x128xf32> to vector<128x128xf32>
    %21 = arith.addf %18, %20 : vector<128x128xf32>
    %cst_17 = arith.constant 0.000000e+00 : f32
    %22 = vector.broadcast %cst_17 : f32 to vector<128x128xf32>
    %23 = arith.maximumf %21, %22 : vector<128x128xf32>
    %c0_18 = arith.constant 0 : index
    %c0_19 = arith.constant 0 : index
    %24 = vector.load %arg8[%c0_18, %c0_19] : memref<128x128xf32, #tpu.memory_space<vmem>>, vector<128x128xf32>
    tpu.vector_store %arg8[%c0_18, %c0_19], %23 {strides = array<i32>} : memref<128x128xf32, #tpu.memory_space<vmem>>, vector<128x128xf32>,
    return
  }
  func.func @transform_0(%arg0: i32) -> (i32, i32) {
    %c0_i32 = arith.constant 0 : i32
    %c0_i32_0 = arith.constant 0 : i32
    return %arg0, %c0_i32 : i32, i32
  }
  func.func @transform_1(%arg0: i32) -> (i32, i32) {
    %c0_i32 = arith.constant 0 : i32
    %c0_i32_0 = arith.constant 0 : i32
    %c0_i32_1 = arith.constant 0 : i32
    return %c0_i32, %c0_i32_0 : i32, i32
  }
  func.func @transform_2(%arg0: i32) -> (i32, i32) {
    %c0_i32 = arith.constant 0 : i32
    %c0_i32_0 = arith.constant 0 : i32
    %c0_i32_1 = arith.constant 0 : i32
    return %c0_i32, %c0_i32_0 : i32, i32
  }
  func.func @transform_3(%arg0: i32) -> (i32, i32) {
    %c0_i32 = arith.constant 0 : i32
    %c0_i32_0 = arith.constant 0 : i32
    %c0_i32_1 = arith.constant 0 : i32
    return %c0_i32, %c0_i32_0 : i32, i32
  }
  func.func @transform_4(%arg0: i32) -> (i32, i32) {
    %c0_i32 = arith.constant 0 : i32
    %c0_i32_0 = arith.constant 0 : i32
    %c0_i32_1 = arith.constant 0 : i32
    return %c0_i32, %c0_i32_0 : i32, i32
  }
  func.func @transform_5(%arg0: i32) -> (i32, i32) {
    %c0_i32 = arith.constant 0 : i32
    %c0_i32_0 = arith.constant 0 : i32
    %c0_i32_1 = arith.constant 0 : i32
    return %c0_i32, %c0_i32_0 : i32, i32
  }
  func.func @transform_6(%arg0: i32) -> (i32, i32) {
    %c0_i32 = arith.constant 0 : i32
    %c0_i32_0 = arith.constant 0 : i32
    %c0_i32_1 = arith.constant 0 : i32
    return %c0_i32, %c0_i32_0 : i32, i32
  }
  func.func @transform_7(%arg0: i32) -> (i32, i32) {
    %c0_i32 = arith.constant 0 : i32
    %c0_i32_0 = arith.constant 0 : i32
    return %arg0, %c0_i32 : i32, i32
  }
}

</mosaic_0001>

<llo_original>
// kernel: mlp_forward.1
$region0: #{mlp_forward.1}
  #allocation0 [shape = 'u32[]', space=smem, size = 0x4, offset = 0x4, fixed_abs, tag = 'smem constant byte address 0x4 - core index']
  #allocation1 [shape = 'u32[72,128]{1,0:T(1,128)}', space=vmem, size = 0x9000, scoped, tag = 'internal scratch']
  %s0 = inlined_call_operand.vmem [shape: bf16[256,128], index: 0, kind: input, shape index: {}]
  %s1 = inlined_call_operand.vmem [shape: bf16[128,128], index: 1, kind: input, shape index: {}]
  %s2 = inlined_call_operand.vmem [shape: f32[1,128], index: 2, kind: input, shape index: {}]
  %s3 = inlined_call_operand.vmem [shape: bf16[128,128], index: 3, kind: input, shape index: {}]
  %s4 = inlined_call_operand.vmem [shape: f32[1,128], index: 4, kind: input, shape index: {}]
  %s5 = inlined_call_operand.vmem [shape: bf16[128,128], index: 5, kind: input, shape index: {}]
  %s6 = inlined_call_operand.vmem [shape: f32[1,128], index: 6, kind: input, shape index: {}]
  %s7 = inlined_call_operand.vmem [shape: f32[256,128], index: 7, kind: output, shape index: {}]
  %s8 = sld [smem:[#allocation0]]
  $region61: #{mlp_forward.1} parent=0
    _
  %s10 = ssub.s32 1, %s8
  %s11 = scalar_select 0, %s10, %s8
  loop: start=0, step=1, limit=4
  $region2: #{mlp_forward.1} parent=0 // loop_pre_header
    _
  $region3: #{mlp_forward.1} parent=0 // loop_header
    %s13 = sphi 0, %s17
    %p14 = scmp.ge.s32.totalorder %s13, 4
    %s23 = sphi 0, %s25
    %s26 = sphi 0, %s23
    %s27 = sphi 0, %s26
    %s43 = sphi 0, %s27
    %s47 = sphi 0, %s47
    %s49 = sphi 0, %s47
    %s50 = sphi 0, %s49
    %s64 = sphi 0, %s50
    %s68 = sphi 0, %s68
    %s70 = sphi 0, %s68
    %s71 = sphi 0, %s70
    %s85 = sphi 0, %s71
    %s89 = sphi 0, %s89
    %s91 = sphi 0, %s89
    %s92 = sphi 0, %s91
    %s106 = sphi 0, %s92
    %s110 = sphi 0, %s110
    %s112 = sphi 0, %s110
    %s113 = sphi 0, %s112
    %s127 = sphi 0, %s113
    %s131 = sphi 0, %s131
    %s133 = sphi 0, %s131
    %s134 = sphi 0, %s133
    %s148 = sphi 0, %s134
    %s152 = sphi 0, %s152
    %s154 = sphi 0, %s152
    %s155 = sphi 0, %s154
    %s169 = sphi 0, %s155
    %s175 = sphi 0, %s177
    %s178 = sphi 0, %s175
    %s179 = sphi 0, %s178
    %s195 = sphi 0, %s179
  $region4: #{mlp_forward.1} parent=0 // loop_header_branch
    %16 = sbr.rel (%p14) target = $region8
  $region5: #{mlp_forward.1} parent=0 // loop_body
    %s18 = ssub.s32 %s13, 1
    %s19 = ssub.s32 %s13, 2
    %s20 = sadd.s32 %s13, 1
    %s21 = ssub.s32 %s13, %s20
    %p22 = scmp.eq.s32.totalorder %s21, 0
    %s24 = sadd.s32 %s23, 1
    %s25 = scalar_select %p22, %s23, %s24
    %p28 = pneg %p22
    %p29 = scmp.eq.s32.totalorder %s13, 1
    %p30 = por %p28, %p29
    %p31 = scmp.ne.s32.totalorder %s23, %s26
    %p32 = scmp.eq.s32.totalorder %s13, 0
    %p33 = por %p31, %p32
    %p34 = scmp.ne.s32.totalorder %s23, %s26
    %p35 = scmp.eq.s32.totalorder %s18, 1
    %p36 = por %p34, %p35
    %p37 = scmp.ne.s32.totalorder %s26, %s27
    %p38 = scmp.eq.s32.totalorder %s18, 0
    %p39 = por %p37, %p38
    %p40 = scmp.ne.s32.totalorder %s26, %s27
    %p41 = scmp.eq.s32.totalorder %s19, 1
    %p42 = por %p40, %p41
    %p44 = scmp.ne.s32.totalorder %s27, %s43
    %p45 = scmp.eq.s32.totalorder %s19, 0
    %p46 = por %p44, %p45
    %s48 = sadd.s32 %s47, 1
    %p51 = scmp.eq.s32.totalorder %s13, 1
    %p52 = scmp.ne.s32.totalorder %s47, %s49
    %p53 = scmp.eq.s32.totalorder %s13, 0
    %p54 = por %p52, %p53
    %p55 = scmp.ne.s32.totalorder %s47, %s49
    %p56 = scmp.eq.s32.totalorder %s18, 1
    %p57 = por %p55, %p56
    %p58 = scmp.ne.s32.totalorder %s49, %s50
    %p59 = scmp.eq.s32.totalorder %s18, 0
    %p60 = por %p58, %p59
    %p61 = scmp.ne.s32.totalorder %s49, %s50
    %p62 = scmp.eq.s32.totalorder %s19, 1
    %p63 = por %p61, %p62
    %p65 = scmp.ne.s32.totalorder %s50, %s64
    %p66 = scmp.eq.s32.totalorder %s19, 0
    %p67 = por %p65, %p66
    %s69 = sadd.s32 %s68, 1
    %p72 = scmp.eq.s32.totalorder %s13, 1
    %p73 = scmp.ne.s32.totalorder %s68, %s70
    %p74 = scmp.eq.s32.totalorder %s13, 0
    %p75 = por %p73, %p74
    %p76 = scmp.ne.s32.totalorder %s68, %s70
    %p77 = scmp.eq.s32.totalorder %s18, 1
    %p78 = por %p76, %p77
    %p79 = scmp.ne.s32.totalorder %s70, %s71
    %p80 = scmp.eq.s32.totalorder %s18, 0
    %p81 = por %p79, %p80
    %p82 = scmp.ne.s32.totalorder %s70, %s71
    %p83 = scmp.eq.s32.totalorder %s19, 1
    %p84 = por %p82, %p83
    %p86 = scmp.ne.s32.totalorder %s71, %s85
    %p87 = scmp.eq.s32.totalorder %s19, 0
    %p88 = por %p86, %p87
    %s90 = sadd.s32 %s89, 1
    %p93 = scmp.eq.s32.totalorder %s13, 1
    %p94 = scmp.ne.s32.totalorder %s89, %s91
    %p95 = scmp.eq.s32.totalorder %s13, 0
    %p96 = por %p94, %p95
    %p97 = scmp.ne.s32.totalorder %s89, %s91
    %p98 = scmp.eq.s32.totalorder %s18, 1
    %p99 = por %p97, %p98
    %p100 = scmp.ne.s32.totalorder %s91, %s92
    %p101 = scmp.eq.s32.totalorder %s18, 0
    %p102 = por %p100, %p101
    %p103 = scmp.ne.s32.totalorder %s91, %s92
    %p104 = scmp.eq.s32.totalorder %s19, 1
    %p105 = por %p103, %p104
    %p107 = scmp.ne.s32.totalorder %s92, %s106
    %p108 = scmp.eq.s32.totalorder %s19, 0
    %p109 = por %p107, %p108
    %s111 = sadd.s32 %s110, 1
    %p114 = scmp.eq.s32.totalorder %s13, 1
    %p115 = scmp.ne.s32.totalorder %s110, %s112
    %p116 = scmp.eq.s32.totalorder %s13, 0
    %p117 = por %p115, %p116
    %p118 = scmp.ne.s32.totalorder %s110, %s112
    %p119 = scmp.eq.s32.totalorder %s18, 1
    %p120 = por %p118, %p119
    %p121 = scmp.ne.s32.totalorder %s112, %s113
    %p122 = scmp.eq.s32.totalorder %s18, 0
    %p123 = por %p121, %p122
    %p124 = scmp.ne.s32.totalorder %s112, %s113
    %p125 = scmp.eq.s32.totalorder %s19, 1
    %p126 = por %p124, %p125
    %p128 = scmp.ne.s32.totalorder %s113, %s127
    %p129 = scmp.eq.s32.totalorder %s19, 0
    %p130 = por %p128, %p129
    %s132 = sadd.s32 %s131, 1
    %p135 = scmp.eq.s32.totalorder %s13, 1
    %p136 = scmp.ne.s32.totalorder %s131, %s133
    %p137 = scmp.eq.s32.totalorder %s13, 0
    %p138 = por %p136, %p137
    %p139 = scmp.ne.s32.totalorder %s131, %s133
    %p140 = scmp.eq.s32.totalorder %s18, 1
    %p141 = por %p139, %p140
    %p142 = scmp.ne.s32.totalorder %s133, %s134
    %p143 = scmp.eq.s32.totalorder %s18, 0
    %p144 = por %p142, %p143
    %p145 = scmp.ne.s32.totalorder %s133, %s134
    %p146 = scmp.eq.s32.totalorder %s19, 1
    %p147 = por %p145, %p146
    %p149 = scmp.ne.s32.totalorder %s134, %s148
    %p150 = scmp.eq.s32.totalorder %s19, 0
    %p151 = por %p149, %p150
    %s153 = sadd.s32 %s152, 1
    %p156 = scmp.eq.s32.totalorder %s13, 1
    %p157 = scmp.ne.s32.totalorder %s152, %s154
    %p158 = scmp.eq.s32.totalorder %s13, 0
    %p159 = por %p157, %p158
    %p160 = scmp.ne.s32.totalorder %s152, %s154
    %p161 = scmp.eq.s32.totalorder %s18, 1
    %p162 = por %p160, %p161
    %p163 = scmp.ne.s32.totalorder %s154, %s155
    %p164 = scmp.eq.s32.totalorder %s18, 0
    %p165 = por %p163, %p164
    %p166 = scmp.ne.s32.totalorder %s154, %s155
    %p167 = scmp.eq.s32.totalorder %s19, 1
    %p168 = por %p166, %p167
    %p170 = scmp.ne.s32.totalorder %s155, %s169
    %p171 = scmp.eq.s32.totalorder %s19, 0
    %p172 = por %p170, %p171
    %s173 = ssub.s32 %s13, %s20
    %p174 = scmp.eq.s32.totalorder %s173, 0
    %s176 = sadd.s32 %s175, 1
    %s177 = scalar_select %p174, %s175, %s176
    %p180 = pneg %p174
    %p181 = scmp.eq.s32.totalorder %s13, 1
    %p182 = por %p180, %p181
    %p183 = scmp.ne.s32.totalorder %s175, %s178
    %p184 = scmp.eq.s32.totalorder %s13, 0
    %p185 = por %p183, %p184
    %p186 = scmp.ne.s32.totalorder %s175, %s178
    %p187 = scmp.eq.s32.totalorder %s18, 1
    %p188 = por %p186, %p187
    %p189 = scmp.ne.s32.totalorder %s178, %s179
    %p190 = scmp.eq.s32.totalorder %s18, 0
    %p191 = por %p189, %p190
    %p192 = scmp.ne.s32.totalorder %s178, %s179
    %p193 = scmp.eq.s32.totalorder %s19, 1
    %p194 = por %p192, %p193
    %p196 = scmp.ne.s32.totalorder %s179, %s195
    %p197 = scmp.eq.s32.totalorder %s19, 0
    %p198 = por %p196, %p197
    %p199 = scmp.le.s32.totalorder 1, %s13
    %p200 = scmp.lt.s32.totalorder %s13, 3
    %p201 = pnand %p199, %p200
    %p202 = pneg %p201
    // Predicated region
    $region9: #{mlp_forward.1} parent=5 // pred_check
      _
    $region10: #{mlp_forward.1} parent=5 // pred_check_branch
      %204 = sbr.rel (%p201) target = $region12
    $region11: #{mlp_forward.1} parent=5 // pred_region
      %s205 = ssub.s32 %s13, 1
      // Predicated region
      $region13: #{mlp_forward.1} parent=11 // pred_check
        %p206 = pneg %p60
      $region14: #{mlp_forward.1} parent=11 // pred_check_branch
        %208 = sbr.rel (%p206) target = $region16
      $region15: #{mlp_forward.1} parent=11 // pred_region
        _
      $region16: #{mlp_forward.1} parent=11 // pred_fallthru
        _
      // Predicated region
      $region17: #{mlp_forward.1} parent=11 // pred_check
        %p209 = pneg %p81
      $region18: #{mlp_forward.1} parent=11 // pred_check_branch
        %211 = sbr.rel (%p209) target = $region20
      $region19: #{mlp_forward.1} parent=11 // pred_region
        _
      $region20: #{mlp_forward.1} parent=11 // pred_fallthru
        _
      // Predicated region
      $region21: #{mlp_forward.1} parent=11 // pred_check
        %p212 = pneg %p102
      $region22: #{mlp_forward.1} parent=11 // pred_check_branch
        %214 = sbr.rel (%p212) target = $region24
      $region23: #{mlp_forward.1} parent=11 // pred_region
        _
      $region24: #{mlp_forward.1} parent=11 // pred_fallthru
        _
      // Predicated region
      $region25: #{mlp_forward.1} parent=11 // pred_check
        %p215 = pneg %p123
      $region26: #{mlp_forward.1} parent=11 // pred_check_branch
        %217 = sbr.rel (%p215) target = $region28
      $region27: #{mlp_forward.1} parent=11 // pred_region
        _
      $region28: #{mlp_forward.1} parent=11 // pred_fallthru
        _
      // Predicated region
      $region29: #{mlp_forward.1} parent=11 // pred_check
        %p218 = pneg %p144
      $region30: #{mlp_forward.1} parent=11 // pred_check_branch
        %220 = sbr.rel (%p218) target = $region32
      $region31: #{mlp_forward.1} parent=11 // pred_region
        _
      $region32: #{mlp_forward.1} parent=11 // pred_fallthru
        _
      // Predicated region
      $region33: #{mlp_forward.1} parent=11 // pred_check
        %p221 = pneg %p165
      $region34: #{mlp_forward.1} parent=11 // pred_check_branch
        %223 = sbr.rel (%p221) target = $region36
      $region35: #{mlp_forward.1} parent=11 // pred_region
        _
      $region36: #{mlp_forward.1} parent=11 // pred_fallthru
        _
    $region12: #{mlp_forward.1} parent=5 // pred_fallthru
      _
    %p224 = scmp.lt.s32.totalorder %s13, 2
    // Predicated region
    $region37: #{mlp_forward.1} parent=5 // pred_check
      %p225 = pneg %p224
    $region38: #{mlp_forward.1} parent=5 // pred_check_branch
      %227 = sbr.rel (%p225) target = $region40
    $region39: #{mlp_forward.1} parent=5 // pred_region
      // Predicated region
      $region41: #{mlp_forward.1} parent=39 // pred_check
        %p228 = pneg %p33
      $region42: #{mlp_forward.1} parent=39 // pred_check_branch
        %230 = sbr.rel (%p228) target = $region44
      $region43: #{mlp_forward.1} parent=39 // pred_region
        %s231 = smul.u32 16, %s13
        %p232 = scmp.lt.s32.totalorder %s231, 31
        %s233 = scalar_select %p232, %s231, 31
        %s234 = smul.addr %s233, 4
        %s235 = scalar_lea.vmem %s0, %s234
        %s236 = smul.u32 16, %s13
      $region44: #{mlp_forward.1} parent=39 // pred_fallthru
        _
    $region40: #{mlp_forward.1} parent=5 // pred_fallthru
      _
    %p237 = scmp.le.s32.totalorder 1, %s13
    %p238 = scmp.lt.s32.totalorder %s13, 3
    %p239 = pnand %p237, %p238
    %p240 = pneg %p239
    // Predicated region
    $region45: #{mlp_forward.1} parent=5 // pred_check
      _
    $region46: #{mlp_forward.1} parent=5 // pred_check_branch
      %242 = sbr.rel (%p239) target = $region48
    $region47: #{mlp_forward.1} parent=5 // pred_region
      %s243 = ssub.s32 %s13, 1
      %s244 = smul.u32 16, %s18
      %p245 = scmp.lt.s32.totalorder %s244, 31
      %s246 = scalar_select %p245, %s244, 31
      %s247 = smul.addr %s246, 4
      %s248 = scalar_lea.vmem %s0, %s247
      %p249 = pneg %p39
      %p250 = pneg %p36
      %p251 = pneg %p60
      %p252 = pneg %p57
      %p253 = pneg %p81
      %p254 = pneg %p78
      %p255 = pneg %p102
      %p256 = pneg %p99
      %p257 = pneg %p123
      %p258 = pneg %p120
      %p259 = pneg %p144
      %p260 = pneg %p141
      %p261 = pneg %p165
      %p262 = pneg %p162
      %p263 = pneg %p191
      %p264 = pneg %p188
      %s265 = smul.u32 16, %s18
      %p266 = scmp.lt.s32.totalorder %s265, 31
      %s267 = scalar_select %p266, %s265, 31
      %s268 = smul.addr %s267, 8
      %s269 = scalar_lea.vmem %s7, %s268
      %s270 = smul.u32 16, %s18
      %p271 = scmp.lt.s32.totalorder %s270, 31
      %s272 = scalar_select %p271, %s270, 31
      %s273 = smul.addr %s272, 4
      %s274 = scalar_lea.vmem %s0, %s273
      %s275 = smul.u32 16, %s18
      %s276 = smul.u32 16, %s18
      %p277 = scmp.lt.s32.totalorder %s276, 31
      %s278 = scalar_select %p277, %s276, 31
      %s279 = smul.addr %s278, 8
      %s280 = scalar_lea.vmem %s7, %s279
      %s281 = smul.u32 16, %s18
      %v282 = vld [vmem:[%s274] sm:$0xf]
      %v283 = vld [vmem:[%s274 + $0x4] sm:$0xf]
      %v284 = vld [vmem:[%s274 + $0x8] sm:$0xf]
      %v285 = vld [vmem:[%s274 + $0xc] sm:$0xf]
      %v286 = vld [vmem:[%s274 + $0x10] sm:$0xf]
      %v287 = vld [vmem:[%s274 + $0x14] sm:$0xf]
      %v288 = vld [vmem:[%s274 + $0x18] sm:$0xf]
      %v289 = vld [vmem:[%s274 + $0x1c] sm:$0xf]
      %v290 = vld [vmem:[%s274 + $0x20] sm:$0xf]
      %v291 = vld [vmem:[%s274 + $0x24] sm:$0xf]
      %v292 = vld [vmem:[%s274 + $0x28] sm:$0xf]
      %v293 = vld [vmem:[%s274 + $0x2c] sm:$0xf]
      %v294 = vld [vmem:[%s274 + $0x30] sm:$0xf]
      %v295 = vld [vmem:[%s274 + $0x34] sm:$0xf]
      %v296 = vld [vmem:[%s274 + $0x38] sm:$0xf]
      %v297 = vld [vmem:[%s274 + $0x3c] sm:$0xf]
      %v298 = vld [vmem:[%s1] sm:$0xf]
      %v299 = vld [vmem:[%s1 + $0x4] sm:$0xf]
      %v300 = vld [vmem:[%s1 + $0x8] sm:$0xf]
      %v301 = vld [vmem:[%s1 + $0xc] sm:$0xf]
      %v302 = vld [vmem:[%s1 + $0x10] sm:$0xf]
      %v303 = vld [vmem:[%s1 + $0x14] sm:$0xf]
      %v304 = vld [vmem:[%s1 + $0x18] sm:$0xf]
      %v305 = vld [vmem:[%s1 + $0x1c] sm:$0xf]
      %v306 = vld [vmem:[%s1 + $0x20] sm:$0xf]
      %v307 = vld [vmem:[%s1 + $0x24] sm:$0xf]
      %v308 = vld [vmem:[%s1 + $0x28] sm:$0xf]
      %v309 = vld [vmem:[%s1 + $0x2c] sm:$0xf]
      %v310 = vld [vmem:[%s1 + $0x30] sm:$0xf]
      %v311 = vld [vmem:[%s1 + $0x34] sm:$0xf]
      %v312 = vld [vmem:[%s1 + $0x38] sm:$0xf]
      %v313 = vld [vmem:[%s1 + $0x3c] sm:$0xf]
      %v314 = vld [vmem:[%s2] sm:$0x1]
      %v316 = vperm.slane %v314, 0
      %v334 = vunpack.c.l.b16 %v282
      %v335 = vunpack.c.l.b16 %v283
      %v336 = vunpack.c.l.b16 %v284
      %v337 = vunpack.c.l.b16 %v285
      %v338 = vunpack.c.l.b16 %v286
      %v339 = vunpack.c.l.b16 %v287
      %v340 = vunpack.c.l.b16 %v288
      %v341 = vunpack.c.l.b16 %v289
      %v342 = vunpack.c.l.b16 %v290
      %v343 = vunpack.c.l.b16 %v291
      %v344 = vunpack.c.l.b16 %v292
      %v345 = vunpack.c.l.b16 %v293
      %v346 = vunpack.c.l.b16 %v294
      %v347 = vunpack.c.l.b16 %v295
      %v348 = vunpack.c.l.b16 %v296
      %v349 = vunpack.c.l.b16 %v297
      %v350 = vpack.c.b16 %v335, %v334
      %v351 = vpack.c.b16 %v337, %v336
      %v352 = vpack.c.b16 %v339, %v338
      %v353 = vpack.c.b16 %v341, %v340
      %v354 = vpack.c.b16 %v343, %v342
      %v355 = vpack.c.b16 %v345, %v344
      %v356 = vpack.c.b16 %v347, %v346
      %v357 = vpack.c.b16 %v349, %v348
      %v382 = vunpack.c.l.b16 %v298
      %v383 = vunpack.c.l.b16 %v299
      %v384 = vunpack.c.l.b16 %v300
      %v385 = vunpack.c.l.b16 %v301
      %v386 = vunpack.c.l.b16 %v302
      %v387 = vunpack.c.l.b16 %v303
      %v388 = vunpack.c.l.b16 %v304
      %v389 = vunpack.c.l.b16 %v305
      %v390 = vunpack.c.l.b16 %v306
      %v391 = vunpack.c.l.b16 %v307
      %v392 = vunpack.c.l.b16 %v308
      %v393 = vunpack.c.l.b16 %v309
      %v394 = vunpack.c.l.b16 %v310
      %v395 = vunpack.c.l.b16 %v311
      %v396 = vunpack.c.l.b16 %v312
      %v397 = vunpack.c.l.b16 %v313
      %v398 = vpack.c.b16 %v383, %v382
      %v399 = vpack.c.b16 %v385, %v384
      %v400 = vpack.c.b16 %v387, %v386
      %v401 = vpack.c.b16 %v389, %v388
      %v402 = vpack.c.b16 %v391, %v390
      %v403 = vpack.c.b16 %v393, %v392
      %v404 = vpack.c.b16 %v395, %v394
      %v405 = vpack.c.b16 %v397, %v396
      %414 = vmatpush.bf16.msra.mxu0 %v405
      %415 = vmatpush.bf16.msra.mxu0 %v404
      %416 = vmatpush.bf16.msra.mxu0 %v403
      %417 = vmatpush.bf16.msra.mxu0 %v402
      %418 = vmatpush.bf16.msra.mxu0 %v401
      %419 = vmatpush.bf16.msra.mxu0 %v400
      %420 = vmatpush.bf16.msra.mxu0 %v399
      %421 = vmatpush.bf16.msra.mxu0 %v398
      %422 = vmatmul.bf16.gmra.mxu0 %v350
      %v423 = vpop.f32.mrf.mxu0
      %v424 = vadd.f32 %v316, %v423
      %v425 = vpop.f32.mrf.mxu0
      %v426 = vadd.f32 %v316, %v425
      %427 = vmatmul.bf16.gmra.mxu0 %v351
      %v428 = vpop.f32.mrf.mxu0
      %v429 = vadd.f32 %v316, %v428
      %v430 = vpop.f32.mrf.mxu0
      %v431 = vadd.f32 %v316, %v430
      %432 = vmatmul.bf16.gmra.mxu0 %v352
      %v433 = vpop.f32.mrf.mxu0
      %v434 = vadd.f32 %v316, %v433
      %v435 = vpop.f32.mrf.mxu0
      %v436 = vadd.f32 %v316, %v435
      %437 = vmatmul.bf16.gmra.mxu0 %v353
      %v438 = vpop.f32.mrf.mxu0
      %v439 = vadd.f32 %v316, %v438
      %v440 = vpop.f32.mrf.mxu0
      %v441 = vadd.f32 %v316, %v440
      %442 = vmatmul.bf16.gmra.mxu0 %v354
      %v443 = vpop.f32.mrf.mxu0
      %v444 = vadd.f32 %v316, %v443
      %v445 = vpop.f32.mrf.mxu0
      %v446 = vadd.f32 %v316, %v445
      %447 = vmatmul.bf16.gmra.mxu0 %v355
      %v448 = vpop.f32.mrf.mxu0
      %v449 = vadd.f32 %v316, %v448
      %v450 = vpop.f32.mrf.mxu0
      %v451 = vadd.f32 %v316, %v450
      %452 = vmatmul.bf16.gmra.mxu0 %v356
      %v453 = vpop.f32.mrf.mxu0
      %v454 = vadd.f32 %v316, %v453
      %v455 = vpop.f32.mrf.mxu0
      %v456 = vadd.f32 %v316, %v455
      %457 = vmatmul.bf16.gmra.mxu0 %v357
      %v458 = vpop.f32.mrf.mxu0
      %v459 = vadd.f32 %v316, %v458
      %v460 = vpop.f32.mrf.mxu0
      %v461 = vadd.f32 %v316, %v460
      %462 = vdwg.mxu0
      %v463 = vmax.f32 %v424, 0.0
      %v464 = vmax.f32 %v426, 0.0
      %v465 = vmax.f32 %v429, 0.0
      %v466 = vmax.f32 %v431, 0.0
      %v467 = vmax.f32 %v434, 0.0
      %v468 = vmax.f32 %v436, 0.0
      %v469 = vmax.f32 %v439, 0.0
      %v470 = vmax.f32 %v441, 0.0
      %v471 = vmax.f32 %v444, 0.0
      %v472 = vmax.f32 %v446, 0.0
      %v473 = vmax.f32 %v449, 0.0
      %v474 = vmax.f32 %v451, 0.0
      %v475 = vmax.f32 %v454, 0.0
      %v476 = vmax.f32 %v456, 0.0
      %v477 = vmax.f32 %v459, 0.0
      %v478 = vmax.f32 %v461, 0.0
      %v479 = vpack.c.bf16 %v464, %v463
      %v480 = vpack.c.bf16 %v466, %v465
      %v481 = vpack.c.bf16 %v468, %v467
      %v482 = vpack.c.bf16 %v470, %v469
      %v483 = vpack.c.bf16 %v472, %v471
      %v484 = vpack.c.bf16 %v474, %v473
      %v485 = vpack.c.bf16 %v476, %v475
      %v486 = vpack.c.bf16 %v478, %v477
      %v487 = vld [vmem:[%s3] sm:$0xf]
      %v488 = vld [vmem:[%s3 + $0x4] sm:$0xf]
      %v489 = vld [vmem:[%s3 + $0x8] sm:$0xf]
      %v490 = vld [vmem:[%s3 + $0xc] sm:$0xf]
      %v491 = vld [vmem:[%s3 + $0x10] sm:$0xf]
      %v492 = vld [vmem:[%s3 + $0x14] sm:$0xf]
      %v493 = vld [vmem:[%s3 + $0x18] sm:$0xf]
      %v494 = vld [vmem:[%s3 + $0x1c] sm:$0xf]
      %v495 = vld [vmem:[%s3 + $0x20] sm:$0xf]
      %v496 = vld [vmem:[%s3 + $0x24] sm:$0xf]
      %v497 = vld [vmem:[%s3 + $0x28] sm:$0xf]
      %v498 = vld [vmem:[%s3 + $0x2c] sm:$0xf]
      %v499 = vld [vmem:[%s3 + $0x30] sm:$0xf]
      %v500 = vld [vmem:[%s3 + $0x34] sm:$0xf]
      %v501 = vld [vmem:[%s3 + $0x38] sm:$0xf]
      %v502 = vld [vmem:[%s3 + $0x3c] sm:$0xf]
      %v503 = vld [vmem:[%s4] sm:$0x1]
      %v505 = vperm.slane %v503, 0
      %v523 = vunpack.c.l.b16 %v487
      %v524 = vunpack.c.l.b16 %v488
      %v525 = vunpack.c.l.b16 %v489
      %v526 = vunpack.c.l.b16 %v490
      %v527 = vunpack.c.l.b16 %v491
      %v528 = vunpack.c.l.b16 %v492
      %v529 = vunpack.c.l.b16 %v493
      %v530 = vunpack.c.l.b16 %v494
      %v531 = vunpack.c.l.b16 %v495
      %v532 = vunpack.c.l.b16 %v496
      %v533 = vunpack.c.l.b16 %v497
      %v534 = vunpack.c.l.b16 %v498
      %v535 = vunpack.c.l.b16 %v499
      %v536 = vunpack.c.l.b16 %v500
      %v537 = vunpack.c.l.b16 %v501
      %v538 = vunpack.c.l.b16 %v502
      %v539 = vpack.c.b16 %v524, %v523
      %v540 = vpack.c.b16 %v526, %v525
      %v541 = vpack.c.b16 %v528, %v527
      %v542 = vpack.c.b16 %v530, %v529
      %v543 = vpack.c.b16 %v532, %v531
      %v544 = vpack.c.b16 %v534, %v533
      %v545 = vpack.c.b16 %v536, %v535
      %v546 = vpack.c.b16 %v538, %v537
      %555 = vmatpush.bf16.msra.mxu0 %v546
      %556 = vmatpush.bf16.msra.mxu0 %v545
      %557 = vmatpush.bf16.msra.mxu0 %v544
      %558 = vmatpush.bf16.msra.mxu0 %v543
      %559 = vmatpush.bf16.msra.mxu0 %v542
      %560 = vmatpush.bf16.msra.mxu0 %v541
      %561 = vmatpush.bf16.msra.mxu0 %v540
      %562 = vmatpush.bf16.msra.mxu0 %v539
      %563 = vmatmul.bf16.gmra.mxu0 %v479
      %v564 = vpop.f32.mrf.mxu0
      %v565 = vadd.f32 %v505, %v564
      %v566 = vpop.f32.mrf.mxu0
      %v567 = vadd.f32 %v505, %v566
      %568 = vmatmul.bf16.gmra.mxu0 %v480
      %v569 = vpop.f32.mrf.mxu0
      %v570 = vadd.f32 %v505, %v569
      %v571 = vpop.f32.mrf.mxu0
      %v572 = vadd.f32 %v505, %v571
      %573 = vmatmul.bf16.gmra.mxu0 %v481
      %v574 = vpop.f32.mrf.mxu0
      %v575 = vadd.f32 %v505, %v574
      %v576 = vpop.f32.mrf.mxu0
      %v577 = vadd.f32 %v505, %v576
      %578 = vmatmul.bf16.gmra.mxu0 %v482
      %v579 = vpop.f32.mrf.mxu0
      %v580 = vadd.f32 %v505, %v579
      %v581 = vpop.f32.mrf.mxu0
      %v582 = vadd.f32 %v505, %v581
      %583 = vmatmul.bf16.gmra.mxu0 %v483
      %v584 = vpop.f32.mrf.mxu0
      %v585 = vadd.f32 %v505, %v584
      %v586 = vpop.f32.mrf.mxu0
      %v587 = vadd.f32 %v505, %v586
      %588 = vmatmul.bf16.gmra.mxu0 %v484
      %v589 = vpop.f32.mrf.mxu0
      %v590 = vadd.f32 %v505, %v589
      %v591 = vpop.f32.mrf.mxu0
      %v592 = vadd.f32 %v505, %v591
      %593 = vmatmul.bf16.gmra.mxu0 %v485
      %v594 = vpop.f32.mrf.mxu0
      %v595 = vadd.f32 %v505, %v594
      %v596 = vpop.f32.mrf.mxu0
      %v597 = vadd.f32 %v505, %v596
      %598 = vmatmul.bf16.gmra.mxu0 %v486
      %v599 = vpop.f32.mrf.mxu0
      %v600 = vadd.f32 %v505, %v599
      %v601 = vpop.f32.mrf.mxu0
      %v602 = vadd.f32 %v505, %v601
      %603 = vdwg.mxu0
      %v604 = vmax.f32 %v565, 0.0
      %v605 = vmax.f32 %v567, 0.0
      %v606 = vmax.f32 %v570, 0.0
      %v607 = vmax.f32 %v572, 0.0
      %v608 = vmax.f32 %v575, 0.0
      %v609 = vmax.f32 %v577, 0.0
      %v610 = vmax.f32 %v580, 0.0
      %v611 = vmax.f32 %v582, 0.0
      %v612 = vmax.f32 %v585, 0.0
      %v613 = vmax.f32 %v587, 0.0
      %v614 = vmax.f32 %v590, 0.0
      %v615 = vmax.f32 %v592, 0.0
      %v616 = vmax.f32 %v595, 0.0
      %v617 = vmax.f32 %v597, 0.0
      %v618 = vmax.f32 %v600, 0.0
      %v619 = vmax.f32 %v602, 0.0
      %v620 = vpack.c.bf16 %v605, %v604
      %v621 = vpack.c.bf16 %v607, %v606
      %v622 = vpack.c.bf16 %v609, %v608
      %v623 = vpack.c.bf16 %v611, %v610
      %v624 = vpack.c.bf16 %v613, %v612
      %v625 = vpack.c.bf16 %v615, %v614
      %v626 = vpack.c.bf16 %v617, %v616
      %v627 = vpack.c.bf16 %v619, %v618
      %v628 = vld [vmem:[%s5] sm:$0xf]
      %v629 = vld [vmem:[%s5 + $0x4] sm:$0xf]
      %v630 = vld [vmem:[%s5 + $0x8] sm:$0xf]
      %v631 = vld [vmem:[%s5 + $0xc] sm:$0xf]
      %v632 = vld [vmem:[%s5 + $0x10] sm:$0xf]
      %v633 = vld [vmem:[%s5 + $0x14] sm:$0xf]
      %v634 = vld [vmem:[%s5 + $0x18] sm:$0xf]
      %v635 = vld [vmem:[%s5 + $0x1c] sm:$0xf]
      %v636 = vld [vmem:[%s5 + $0x20] sm:$0xf]
      %v637 = vld [vmem:[%s5 + $0x24] sm:$0xf]
      %v638 = vld [vmem:[%s5 + $0x28] sm:$0xf]
      %v639 = vld [vmem:[%s5 + $0x2c] sm:$0xf]
      %v640 = vld [vmem:[%s5 + $0x30] sm:$0xf]
      %v641 = vld [vmem:[%s5 + $0x34] sm:$0xf]
      %v642 = vld [vmem:[%s5 + $0x38] sm:$0xf]
      %v643 = vld [vmem:[%s5 + $0x3c] sm:$0xf]
      %v644 = vld [vmem:[%s6] sm:$0x1]
      %v646 = vperm.slane %v644, 0
      %v664 = vunpack.c.l.b16 %v628
      %v665 = vunpack.c.l.b16 %v629
      %v666 = vunpack.c.l.b16 %v630
      %v667 = vunpack.c.l.b16 %v631
      %v668 = vunpack.c.l.b16 %v632
      %v669 = vunpack.c.l.b16 %v633
      %v670 = vunpack.c.l.b16 %v634
      %v671 = vunpack.c.l.b16 %v635
      %v672 = vunpack.c.l.b16 %v636
      %v673 = vunpack.c.l.b16 %v637
      %v674 = vunpack.c.l.b16 %v638
      %v675 = vunpack.c.l.b16 %v639
      %v676 = vunpack.c.l.b16 %v640
      %v677 = vunpack.c.l.b16 %v641
      %v678 = vunpack.c.l.b16 %v642
      %v679 = vunpack.c.l.b16 %v643
      %v680 = vpack.c.b16 %v665, %v664
      %v681 = vpack.c.b16 %v667, %v666
      %v682 = vpack.c.b16 %v669, %v668
      %v683 = vpack.c.b16 %v671, %v670
      %v684 = vpack.c.b16 %v673, %v672
      %v685 = vpack.c.b16 %v675, %v674
      %v686 = vpack.c.b16 %v677, %v676
      %v687 = vpack.c.b16 %v679, %v678
      %696 = vmatpush.bf16.msra.mxu0 %v687
      %697 = vmatpush.bf16.msra.mxu0 %v686
      %698 = vmatpush.bf16.msra.mxu0 %v685
      %699 = vmatpush.bf16.msra.mxu0 %v684
      %700 = vmatpush.bf16.msra.mxu0 %v683
      %701 = vmatpush.bf16.msra.mxu0 %v682
      %702 = vmatpush.bf16.msra.mxu0 %v681
      %703 = vmatpush.bf16.msra.mxu0 %v680
      %704 = vmatmul.bf16.gmra.mxu0 %v620
      %v705 = vpop.f32.mrf.mxu0
      %v706 = vadd.f32 %v646, %v705
      %v707 = vpop.f32.mrf.mxu0
      %v708 = vadd.f32 %v646, %v707
      %709 = vmatmul.bf16.gmra.mxu0 %v621
      %v710 = vpop.f32.mrf.mxu0
      %v711 = vadd.f32 %v646, %v710
      %v712 = vpop.f32.mrf.mxu0
      %v713 = vadd.f32 %v646, %v712
      %714 = vmatmul.bf16.gmra.mxu0 %v622
      %v715 = vpop.f32.mrf.mxu0
      %v716 = vadd.f32 %v646, %v715
      %v717 = vpop.f32.mrf.mxu0
      %v718 = vadd.f32 %v646, %v717
      %719 = vmatmul.bf16.gmra.mxu0 %v623
      %v720 = vpop.f32.mrf.mxu0
      %v721 = vadd.f32 %v646, %v720
      %v722 = vpop.f32.mrf.mxu0
      %v723 = vadd.f32 %v646, %v722
      %724 = vmatmul.bf16.gmra.mxu0 %v624
      %v725 = vpop.f32.mrf.mxu0
      %v726 = vadd.f32 %v646, %v725
      %v727 = vpop.f32.mrf.mxu0
      %v728 = vadd.f32 %v646, %v727
      %729 = vmatmul.bf16.gmra.mxu0 %v625
      %v730 = vpop.f32.mrf.mxu0
      %v731 = vadd.f32 %v646, %v730
      %v732 = vpop.f32.mrf.mxu0
      %v733 = vadd.f32 %v646, %v732
      %734 = vmatmul.bf16.gmra.mxu0 %v626
      %v735 = vpop.f32.mrf.mxu0
      %v736 = vadd.f32 %v646, %v735
      %v737 = vpop.f32.mrf.mxu0
      %v738 = vadd.f32 %v646, %v737
      %739 = vmatmul.bf16.gmra.mxu0 %v627
      %v740 = vpop.f32.mrf.mxu0
      %v741 = vadd.f32 %v646, %v740
      %v742 = vpop.f32.mrf.mxu0
      %v743 = vadd.f32 %v646, %v742
      %744 = vdwg.mxu0
      %v745 = vmax.f32 %v706, 0.0
      %v746 = vmax.f32 %v708, 0.0
      %v747 = vmax.f32 %v711, 0.0
      %v748 = vmax.f32 %v713, 0.0
      %v749 = vmax.f32 %v716, 0.0
      %v750 = vmax.f32 %v718, 0.0
      %v751 = vmax.f32 %v721, 0.0
      %v752 = vmax.f32 %v723, 0.0
      %v753 = vmax.f32 %v726, 0.0
      %v754 = vmax.f32 %v728, 0.0
      %v755 = vmax.f32 %v731, 0.0
      %v756 = vmax.f32 %v733, 0.0
      %v757 = vmax.f32 %v736, 0.0
      %v758 = vmax.f32 %v738, 0.0
      %v759 = vmax.f32 %v741, 0.0
      %v760 = vmax.f32 %v743, 0.0
      %761 = vst [vmem:[%s280] sm:$0xff] %v745
      %762 = vst [vmem:[%s280 + $0x8] sm:$0xff] %v746
      %763 = vst [vmem:[%s280 + $0x10] sm:$0xff] %v747
      %764 = vst [vmem:[%s280 + $0x18] sm:$0xff] %v748
      %765 = vst [vmem:[%s280 + $0x20] sm:$0xff] %v749
      %766 = vst [vmem:[%s280 + $0x28] sm:$0xff] %v750
      %767 = vst [vmem:[%s280 + $0x30] sm:$0xff] %v751
      %768 = vst [vmem:[%s280 + $0x38] sm:$0xff] %v752
      %769 = vst [vmem:[%s280 + $0x40] sm:$0xff] %v753
      %770 = vst [vmem:[%s280 + $0x48] sm:$0xff] %v754
      %771 = vst [vmem:[%s280 + $0x50] sm:$0xff] %v755
      %772 = vst [vmem:[%s280 + $0x58] sm:$0xff] %v756
      %773 = vst [vmem:[%s280 + $0x60] sm:$0xff] %v757
      %774 = vst [vmem:[%s280 + $0x68] sm:$0xff] %v758
      %775 = vst [vmem:[%s280 + $0x70] sm:$0xff] %v759
      %776 = vst [vmem:[%s280 + $0x78] sm:$0xff] %v760
      %s777 = smul.u32 16, %s18
      %p778 = scmp.lt.s32.totalorder %s777, 31
      %s779 = scalar_select %p778, %s777, 31
      %s780 = smul.addr %s779, 8
      %s781 = scalar_lea.vmem %s7, %s780
      // Predicated region
      $region49: #{mlp_forward.1} parent=47 // pred_check
        %p782 = pneg %p188
      $region50: #{mlp_forward.1} parent=47 // pred_check_branch
        %784 = sbr.rel (%p782) target = $region52
      $region51: #{mlp_forward.1} parent=47 // pred_region
        %s785 = smul.u32 16, %s18
      $region52: #{mlp_forward.1} parent=47 // pred_fallthru
        _
    $region48: #{mlp_forward.1} parent=5 // pred_fallthru
      _
    %p786 = scmp.le.s32.totalorder 2, %s13
    // Predicated region
    $region53: #{mlp_forward.1} parent=5 // pred_check
      %p787 = pneg %p786
    $region54: #{mlp_forward.1} parent=5 // pred_check_branch
      %789 = sbr.rel (%p787) target = $region56
    $region55: #{mlp_forward.1} parent=5 // pred_region
      %s790 = ssub.s32 %s13, 2
      // Predicated region
      $region57: #{mlp_forward.1} parent=55 // pred_check
        %p791 = pneg %p194
      $region58: #{mlp_forward.1} parent=55 // pred_check_branch
        %793 = sbr.rel (%p791) target = $region60
      $region59: #{mlp_forward.1} parent=55 // pred_region
        %s794 = smul.u32 16, %s19
        %p795 = scmp.lt.s32.totalorder %s794, 31
        %s796 = scalar_select %p795, %s794, 31
        %s797 = smul.addr %s796, 8
        %s798 = scalar_lea.vmem %s7, %s797
      $region60: #{mlp_forward.1} parent=55 // pred_fallthru
        _
    $region56: #{mlp_forward.1} parent=5 // pred_fallthru
      _
  $region6: #{mlp_forward.1} parent=0 // loop_footer
    %s17 = sadd.s32 1, %s13
  $region7: #{mlp_forward.1} parent=0 // loop_footer_branch
    %12 = sbr.rel target = $region3
  $region8: #{mlp_forward.1} parent=0 // loop_exit
    _

</llo_original>
